<compile_context>
chip_gen: v6e
topology: v6e:2x2x1
jax: 0.10.0
libtpu: 0.0.40
codegen_flags: <defaults>
</compile_context>

<pallas_src>
import functools

import jax
import jax.numpy as jnp
from jax.experimental import pallas as pl
from jax.experimental.pallas import tpu as pltpu

EPS = 1e-5


def _small_res_block_kernel(x_ref, gamma_ref, beta_ref, w_ref, b_ref, o_ref,
                            *, num_groups, H, W, stripe, apron):
    """One grid step == one image, channels-major (Cin, H*W), spatial on lanes."""
    Cin = x_ref.shape[1]
    HW = x_ref.shape[2]
    G = num_groups
    Cg = Cin // G
    L = stripe
    n_stripes = HW // L

    x = x_ref[0].astype(jnp.float32)                          # (Cin, HW)

    # ---- GroupNorm: two-pass stats (f32), per-channel affine ----
    x3 = x.reshape(G, Cg, HW)                                  # split sublane dim (free)
    mu = jnp.mean(x3, axis=(1, 2), keepdims=True)
    var = jnp.mean((x3 - mu) * (x3 - mu), axis=(1, 2), keepdims=True)
    xn = ((x3 - mu) * jax.lax.rsqrt(var + EPS)).reshape(Cin, HW)
    h = xn * gamma_ref[...] + beta_ref[...]                    # (Cin,1) broadcasts on lanes

    # ---- SiLU, then cast to bf16 once (halves all downstream tap/select vreg traffic) ----
    h = h * jax.nn.sigmoid(h)
    h_bf = h.astype(jnp.bfloat16)
    x_bf = x.astype(jnp.bfloat16)                              # skip path operand

    # ---- zero apron: taps that step outside the image read zeros == conv zero padding ----
    zpad = jnp.zeros((Cin, apron), jnp.bfloat16)
    h_pad = jnp.concatenate([zpad, h_bf, zpad], axis=1)        # (Cin, HW + 2*apron), aligned

    # Column (dx) masks are static because the stripe length is a multiple of W.
    col = jax.lax.broadcasted_iota(jnp.int32, (1, L), 1) % W
    m_left = col >= 1                                          # dx == -1 taps
    m_right = col <= W - 2                                     # dx == +1 taps

    w = w_ref[...]                                             # (Cout, 10*Cin) bf16, resident
    b = b_ref[...]                                             # (Cout, 1) f32

    # ---- per-stripe im2col (bf16) + one fused MXU matmul (conv3x3 + 1x1 skip, bias folded) ----
    for t in range(n_stripes):                                 # small static trip count
        base = t * L
        parts = []
        for dy in range(3):
            for dx in range(3):
                off = (dy - 1) * W + (dx - 1)                  # flattened spatial offset
                tap = h_pad[:, base + apron + off: base + apron + off + L]
                if dx == 0:
                    tap = jnp.where(m_left, tap, jnp.zeros_like(tap))
                elif dx == 2:
                    tap = jnp.where(m_right, tap, jnp.zeros_like(tap))
                parts.append(tap)
        parts.append(x_bf[:, base:base + L])                   # 1x1 skip uses raw input
        lhs = jnp.concatenate(parts, axis=0)                   # (10*Cin, L) bf16
        out = jnp.dot(w, lhs, preferred_element_type=jnp.float32) + b   # (Cout, L) f32
        o_ref[0, :, pl.ds(base, L)] = out.astype(o_ref.dtype)  # lane-dense stripe store


def small_res_block(x_nchw, gamma, beta, w3_oihw, b3, w1_oihw, b1, *, num_groups):
    """x_nchw: (N, Cin, H, W).  w3_oihw: (Cout, Cin, 3, 3).  w1_oihw: (Cout, Cin, 1, 1)."""
    N, Cin, H, W = x_nchw.shape
    Cout = w3_oihw.shape[0]
    HW = H * W
    assert Cin % num_groups == 0
    assert HW % 128 == 0, "channels-major layout wants H*W to be a lane multiple (128)"
    assert W >= 3

    # Stripe length: multiple of W (static column masks), divides HW, close to 512-2048
    # lanes; for small images we force >=2 stripes so the stripe path stays exercised.
    target = max(128, min(2048, HW // 2))
    stripe = W
    cand = W
    while cand <= HW:
        if HW % cand == 0 and cand <= target:
            stripe = cand
        cand += W
    apron = ((W + 1 + 127) // 128) * 128                       # covers the max tap offset W+1

    # Channels-major view of the NCHW input: a free reshape, no transpose passes.
    x = x_nchw.reshape(N, Cin, HW)

    # Fused weight: rows = Cout, columns = [9 conv taps ordered (dy, dx, c)] ++ [skip (c)].
    w3_t = jnp.transpose(w3_oihw, (0, 2, 3, 1)).reshape(Cout, 9 * Cin)
    w1_t = w1_oihw.reshape(Cout, Cin)
    w_fused = jnp.concatenate([w3_t, w1_t], axis=1).astype(jnp.bfloat16)   # (Cout, 10*Cin)
    b_fused = (b3 + b1).reshape(Cout, 1).astype(jnp.float32)
    gamma2 = gamma.reshape(Cin, 1).astype(jnp.float32)
    beta2 = beta.reshape(Cin, 1).astype(jnp.float32)

    out_dtype = x_nchw.dtype                                   # bf16 in -> bf16 out

    kernel = functools.partial(_small_res_block_kernel, num_groups=num_groups,
                               H=H, W=W, stripe=stripe, apron=apron)

    # Explicit VMEM budget: double-buffered whole-image in/out blocks + apron'd bf16
    # activations + per-stripe im2col / accumulator + fused weight, with headroom.
    in_item = jnp.dtype(x_nchw.dtype).itemsize
    out_item = jnp.dtype(out_dtype).itemsize
    vmem_est = (2 * Cin * HW * in_item + 2 * Cout * HW * out_item
                + Cin * (HW + 2 * apron) * 2
                + 19 * Cin * stripe * 2 + Cout * stripe * 4
                + 10 * Cin * Cout * 2)
    vmem_limit = int(min(max(2 * vmem_est, 32 * 2**20), 64 * 2**20))

    cost = pl.CostEstimate(
        flops=int(2 * N * Cout * 10 * Cin * HW),
        transcendentals=int(N * Cin * HW),
        bytes_accessed=int(N * Cin * HW * in_item + N * Cout * HW * out_item
                           + 10 * Cin * Cout * 2 + (Cout + 2 * Cin) * 4),
    )

    out = pl.pallas_call(
        kernel,
        out_shape=jax.ShapeDtypeStruct((N, Cout, HW), out_dtype),
        grid=(N,),
        in_specs=[
            pl.BlockSpec((1, Cin, HW), lambda n: (n, 0, 0)),        # x, one image per step
            pl.BlockSpec((Cin, 1), lambda n: (0, 0)),               # gamma
            pl.BlockSpec((Cin, 1), lambda n: (0, 0)),               # beta
            pl.BlockSpec((Cout, 10 * Cin), lambda n: (0, 0)),       # fused conv3x3+skip weight
            pl.BlockSpec((Cout, 1), lambda n: (0, 0)),              # fused bias
        ],
        out_specs=pl.BlockSpec((1, Cout, HW), lambda n: (n, 0, 0)),  # lane-dense (HW lanes)
        compiler_params=pltpu.CompilerParams(
            dimension_semantics=("parallel",),
            vmem_limit_bytes=vmem_limit),
        cost_estimate=cost,
    )(x, gamma2, beta2, w_fused, b_fused)

    return out.reshape(N, Cout, H, W)


def _reference(x_nchw, gamma, beta, w3_oihw, b3, w1_oihw, b1, *, num_groups):
    """Plain-JAX reference matching PyTorch SmallResBlock semantics (NCHW, f32)."""
    N, Cin, H, W = x_nchw.shape
    Cout = w3_oihw.shape[0]
    xr = x_nchw.reshape(N, num_groups, -1)
    mu = xr.mean(axis=2, keepdims=True)
    var = ((xr - mu) ** 2).mean(axis=2, keepdims=True)
    xn = ((xr - mu) / jnp.sqrt(var + EPS)).reshape(N, Cin, H, W)
    h = xn * gamma.reshape(1, Cin, 1, 1) + beta.reshape(1, Cin, 1, 1)
    h = h * jax.nn.sigmoid(h)
    w3_hwio = jnp.transpose(w3_oihw, (2, 3, 1, 0))
    conv = jax.lax.conv_general_dilated(
        h, w3_hwio, (1, 1), "SAME",
        dimension_numbers=("NCHW", "HWIO", "NCHW")) + b3.reshape(1, Cout, 1, 1)
    w1_hwio = jnp.transpose(w1_oihw, (2, 3, 1, 0))
    skip = jax.lax.conv_general_dilated(
        x_nchw, w1_hwio, (1, 1), "SAME",
        dimension_numbers=("NCHW", "HWIO", "NCHW")) + b1.reshape(1, Cout, 1, 1)
    return skip + conv


if __name__ == "__main__":
    N, Cin, Cout, H, W = 2, 4, 8, 16, 16
    num_groups = max(1, Cin // 32)   # == 1 for small channel counts

    key = jax.random.PRNGKey(0)
    kx, kg, kb, kw3, kb3, kw1, kb1 = jax.random.split(key, 7)

    x = jax.random.normal(kx, (N, Cin, H, W), jnp.float32)
    gamma = 1.0 + 0.1 * jax.random.normal(kg, (Cin,), jnp.float32)
    beta = 0.1 * jax.random.normal(kb, (Cin,), jnp.float32)
    w3 = 0.1 * jax.random.normal(kw3, (Cout, Cin, 3, 3), jnp.float32)   # PyTorch OIHW
    b3 = 0.1 * jax.random.normal(kb3, (Cout,), jnp.float32)
    w1 = 0.1 * jax.random.normal(kw1, (Cout, Cin, 1, 1), jnp.float32)   # PyTorch OIHW
    b1 = 0.1 * jax.random.normal(kb1, (Cout,), jnp.float32)

    out = small_res_block(x, gamma, beta, w3, b3, w1, b1, num_groups=num_groups)
    out = jax.block_until_ready(out)

    ref = _reference(x, gamma, beta, w3, b3, w1, b1, num_groups=num_groups)
    assert out.shape == (N, Cout, H, W)
    max_err = float(jnp.max(jnp.abs(out - ref)))
    # bf16 MXU operands with f32 accumulation -> slightly looser tolerance than pure f32.
    assert jnp.allclose(out, ref, atol=5e-2, rtol=5e-2), f"mismatch vs reference, max err {max_err}"

    print("KERNEL_OK")
</pallas_src>

<mosaic_0001>
module attributes {stable_mosaic.version = 11 : i64} {
  func.func @_small_res_block_kernel(%arg0: i32, %arg1: memref<1x4x256xf32, #tpu.memory_space<vmem>>, %arg2: memref<4x1xf32, #tpu.memory_space<vmem>>, %arg3: memref<4x1xf32, #tpu.memory_space<vmem>>, %arg4: memref<8x40xbf16, #tpu.memory_space<vmem>>, %arg5: memref<8x1xf32, #tpu.memory_space<vmem>>, %arg6: memref<1x8x256xf32, #tpu.memory_space<vmem>>) attributes {dimension_semantics = [#tpu.dimension_semantics<parallel>], iteration_bounds = array<i64: 2>, scalar_prefetch = 0 : i64, scratch_operands = 0 : i64, tpu.core_type = #tpu.core_type<tc>, window_params = [{transform_indices = @transform_0, window_bounds = array<i64: 1, 4, 256>}, {pipeline_mode = #tpu.pipeline_mode<synchronous>, transform_indices = @transform_1, window_bounds = array<i64: 4, 1>}, {pipeline_mode = #tpu.pipeline_mode<synchronous>, transform_indices = @transform_2, window_bounds = array<i64: 4, 1>}, {pipeline_mode = #tpu.pipeline_mode<synchronous>, transform_indices = @transform_3, window_bounds = array<i64: 8, 40>}, {pipeline_mode = #tpu.pipeline_mode<synchronous>, transform_indices = @transform_4, window_bounds = array<i64: 8, 1>}, {transform_indices = @transform_5, window_bounds = array<i64: 1, 8, 256>}]} {
    %c0 = arith.constant 0 : index
    %c0_0 = arith.constant 0 : index
    %c0_1 = arith.constant 0 : index
    %0 = vector.load %arg1[%c0, %c0_0, %c0_1] : memref<1x4x256xf32, #tpu.memory_space<vmem>>, vector<1x4x256xf32>
    %1 = vector.shape_cast %0 : vector<1x4x256xf32> to vector<4x256xf32>
    %2 = vector.shape_cast %1 : vector<4x256xf32> to vector<1x4x256xf32>
    %cst = arith.constant dense<0.000000e+00> : vector<1xf32>
    %3 = vector.multi_reduction <add>, %2, %cst [1, 2] : vector<1x4x256xf32> to vector<1xf32>
    %4 = vector.shape_cast %3 : vector<1xf32> to vector<1x1x1xf32>
    %cst_2 = arith.constant 1.024000e+03 : f32
    %5 = vector.broadcast %cst_2 : f32 to vector<1x1x1xf32>
    %6 = arith.divf %4, %5 : vector<1x1x1xf32>
    %7 = vector.broadcast %6 : vector<1x1x1xf32> to vector<1x4x256xf32>
    %8 = arith.subf %2, %7 : vector<1x4x256xf32>
    %9 = vector.broadcast %6 : vector<1x1x1xf32> to vector<1x4x256xf32>
    %10 = arith.subf %2, %9 : vector<1x4x256xf32>
    %11 = arith.mulf %8, %10 : vector<1x4x256xf32>
    %cst_3 = arith.constant dense<0.000000e+00> : vector<1xf32>
    %12 = vector.multi_reduction <add>, %11, %cst_3 [1, 2] : vector<1x4x256xf32> to vector<1xf32>
    %13 = vector.shape_cast %12 : vector<1xf32> to vector<1x1x1xf32>
    %cst_4 = arith.constant 1.024000e+03 : f32
    %14 = vector.broadcast %cst_4 : f32 to vector<1x1x1xf32>
    %15 = arith.divf %13, %14 : vector<1x1x1xf32>
    %16 = vector.broadcast %6 : vector<1x1x1xf32> to vector<1x4x256xf32>
    %17 = arith.subf %2, %16 : vector<1x4x256xf32>
    %cst_5 = arith.constant 9.99999974E-6 : f32
    %18 = vector.broadcast %cst_5 : f32 to vector<1x1x1xf32>
    %19 = arith.addf %15, %18 : vector<1x1x1xf32>
    %20 = math.rsqrt %19 : vector<1x1x1xf32>
    %21 = vector.broadcast %20 : vector<1x1x1xf32> to vector<1x4x256xf32>
    %22 = arith.mulf %17, %21 : vector<1x4x256xf32>
    %23 = vector.shape_cast %22 : vector<1x4x256xf32> to vector<4x256xf32>
    %c0_6 = arith.constant 0 : index
    %c0_7 = arith.constant 0 : index
    %24 = vector.load %arg2[%c0_6, %c0_7] : memref<4x1xf32, #tpu.memory_space<vmem>>, vector<4x1xf32>
    %25 = vector.broadcast %24 : vector<4x1xf32> to vector<4x256xf32>
    %26 = arith.mulf %23, %25 : vector<4x256xf32>
    %c0_8 = arith.constant 0 : index
    %c0_9 = arith.constant 0 : index
    %27 = vector.load %arg3[%c0_8, %c0_9] : memref<4x1xf32, #tpu.memory_space<vmem>>, vector<4x1xf32>
    %28 = vector.broadcast %27 : vector<4x1xf32> to vector<4x256xf32>
    %29 = arith.addf %26, %28 : vector<4x256xf32>
    %30 = arith.negf %29 : vector<4x256xf32>
    %31 = math.exp %30 : vector<4x256xf32>
    %cst_10 = arith.constant 1.000000e+00 : f32
    %32 = vector.broadcast %cst_10 : f32 to vector<4x256xf32>
    %33 = arith.addf %32, %31 : vector<4x256xf32>
    %34 = arith.divf %32, %33 : vector<4x256xf32>
    %35 = arith.mulf %29, %34 : vector<4x256xf32>
    %36 = arith.truncf %35 : vector<4x256xf32> to vector<4x256xbf16>
    %37 = arith.truncf %1 : vector<4x256xf32> to vector<4x256xbf16>
    %cst_11 = arith.constant 0.000000e+00 : bf16
    %38 = vector.broadcast %cst_11 : bf16 to vector<4x128xbf16>
    %39 = tpu.concatenate %38, %36, %38 in 1 : vector<4x128xbf16>, vector<4x256xbf16>, vector<4x128xbf16> -> vector<4x512xbf16>
    %40 = tpu.iota {dimensions = array<i32: 1>} : vector<1x128xi32>
    %c16_i32 = arith.constant 16 : i32
    %c0_i32 = arith.constant 0 : i32
    %41 = arith.cmpi eq, %c16_i32, %c0_i32 : i32
    %c1_i32 = arith.constant 1 : i32
    %42 = arith.select %41, %c1_i32, %c16_i32 : i32
    %43 = vector.broadcast %42 : i32 to vector<1x128xi32>
    %44 = arith.remsi %40, %43 : vector<1x128xi32>
    %c0_i32_12 = arith.constant 0 : i32
    %45 = vector.broadcast %c0_i32_12 : i32 to vector<1x128xi32>
    %46 = arith.cmpi ne, %44, %45 : vector<1x128xi32>
    %c0_i32_13 = arith.constant 0 : i32
    %47 = vector.broadcast %c0_i32_13 : i32 to vector<1x128xi32>
    %48 = arith.cmpi slt, %44, %47 : vector<1x128xi32>
    %c0_i32_14 = arith.constant 0 : i32
    %49 = arith.cmpi slt, %42, %c0_i32_14 : i32
    %50 = vector.broadcast %49 : i1 to vector<1x128xi1>
    %51 = vector.broadcast %50 : vector<1x128xi1> to vector<1x128xi1>
    %52 = arith.xori %48, %51 : vector<1x128xi1>
    %53 = arith.andi %52, %46 : vector<1x128xi1>
    %54 = vector.broadcast %42 : i32 to vector<1x128xi32>
    %55 = arith.addi %44, %54 : vector<1x128xi32>
    %56 = arith.select %53, %55, %44 : vector<1x128xi1>, vector<1x128xi32>
    %c1_i32_15 = arith.constant 1 : i32
    %57 = vector.broadcast %c1_i32_15 : i32 to vector<1x128xi32>
    %58 = arith.cmpi sge, %56, %57 : vector<1x128xi32>
    %c14_i32 = arith.constant 14 : i32
    %59 = vector.broadcast %c14_i32 : i32 to vector<1x128xi32>
    %60 = arith.cmpi sle, %56, %59 : vector<1x128xi32>
    %c0_16 = arith.constant 0 : index
    %c0_17 = arith.constant 0 : index
    %61 = vector.load %arg4[%c0_16, %c0_17] : memref<8x40xbf16, #tpu.memory_space<vmem>>, vector<8x40xbf16>
    %c0_18 = arith.constant 0 : index
    %c0_19 = arith.constant 0 : index
    %62 = vector.load %arg5[%c0_18, %c0_19] : memref<8x1xf32, #tpu.memory_space<vmem>>, vector<8x1xf32>
    %63 = vector.extract_strided_slice %39 {offsets = [0, 111], sizes = [4, 128], strides = [1, 1]} : vector<4x512xbf16> to vector<4x128xbf16>
    %cst_20 = arith.constant 0.000000e+00 : bf16
    %64 = vector.broadcast %cst_20 : bf16 to vector<4x128xbf16>
    %65 = vector.shape_cast %58 : vector<1x128xi1> to vector<1x128xi1>
    %66 = vector.broadcast %65 : vector<1x128xi1> to vector<4x128xi1>
    %67 = arith.select %66, %63, %64 : vector<4x128xi1>, vector<4x128xbf16>
    %68 = vector.extract_strided_slice %39 {offsets = [0, 112], sizes = [4, 128], strides = [1, 1]} : vector<4x512xbf16> to vector<4x128xbf16>
    %69 = vector.extract_strided_slice %39 {offsets = [0, 113], sizes = [4, 128], strides = [1, 1]} : vector<4x512xbf16> to vector<4x128xbf16>
    %cst_21 = arith.constant 0.000000e+00 : bf16
    %70 = vector.broadcast %cst_21 : bf16 to vector<4x128xbf16>
    %71 = vector.shape_cast %60 : vector<1x128xi1> to vector<1x128xi1>
    %72 = vector.broadcast %71 : vector<1x128xi1> to vector<4x128xi1>
    %73 = arith.select %72, %69, %70 : vector<4x128xi1>, vector<4x128xbf16>
    %74 = vector.extract_strided_slice %39 {offsets = [0, 127], sizes = [4, 128], strides = [1, 1]} : vector<4x512xbf16> to vector<4x128xbf16>
    %cst_22 = arith.constant 0.000000e+00 : bf16
    %75 = vector.broadcast %cst_22 : bf16 to vector<4x128xbf16>
    %76 = vector.shape_cast %58 : vector<1x128xi1> to vector<1x128xi1>
    %77 = vector.broadcast %76 : vector<1x128xi1> to vector<4x128xi1>
    %78 = arith.select %77, %74, %75 : vector<4x128xi1>, vector<4x128xbf16>
    %79 = vector.extract_strided_slice %39 {offsets = [0, 128], sizes = [4, 128], strides = [1, 1]} : vector<4x512xbf16> to vector<4x128xbf16>
    %80 = vector.extract_strided_slice %39 {offsets = [0, 129], sizes = [4, 128], strides = [1, 1]} : vector<4x512xbf16> to vector<4x128xbf16>
    %cst_23 = arith.constant 0.000000e+00 : bf16
    %81 = vector.broadcast %cst_23 : bf16 to vector<4x128xbf16>
    %82 = vector.shape_cast %60 : vector<1x128xi1> to vector<1x128xi1>
    %83 = vector.broadcast %82 : vector<1x128xi1> to vector<4x128xi1>
    %84 = arith.select %83, %80, %81 : vector<4x128xi1>, vector<4x128xbf16>
    %85 = vector.extract_strided_slice %39 {offsets = [0, 143], sizes = [4, 128], strides = [1, 1]} : vector<4x512xbf16> to vector<4x128xbf16>
    %cst_24 = arith.constant 0.000000e+00 : bf16
    %86 = vector.broadcast %cst_24 : bf16 to vector<4x128xbf16>
    %87 = vector.shape_cast %58 : vector<1x128xi1> to vector<1x128xi1>
    %88 = vector.broadcast %87 : vector<1x128xi1> to vector<4x128xi1>
    %89 = arith.select %88, %85, %86 : vector<4x128xi1>, vector<4x128xbf16>
    %90 = vector.extract_strided_slice %39 {offsets = [0, 144], sizes = [4, 128], strides = [1, 1]} : vector<4x512xbf16> to vector<4x128xbf16>
    %91 = vector.extract_strided_slice %39 {offsets = [0, 145], sizes = [4, 128], strides = [1, 1]} : vector<4x512xbf16> to vector<4x128xbf16>
    %cst_25 = arith.constant 0.000000e+00 : bf16
    %92 = vector.broadcast %cst_25 : bf16 to vector<4x128xbf16>
    %93 = vector.shape_cast %60 : vector<1x128xi1> to vector<1x128xi1>
    %94 = vector.broadcast %93 : vector<1x128xi1> to vector<4x128xi1>
    %95 = arith.select %94, %91, %92 : vector<4x128xi1>, vector<4x128xbf16>
    %96 = vector.extract_strided_slice %37 {offsets = [0, 0], sizes = [4, 128], strides = [1, 1]} : vector<4x256xbf16> to vector<4x128xbf16>
    %97 = tpu.concatenate %67, %68, %73, %78, %79, %84, %89, %90, %95, %96 in 0 : vector<4x128xbf16>, vector<4x128xbf16>, vector<4x128xbf16>, vector<4x128xbf16>, vector<4x128xbf16>, vector<4x128xbf16>, vector<4x128xbf16>, vector<4x128xbf16>, vector<4x128xbf16>, vector<4x128xbf16> -> vector<40x128xbf16>
    %cst_26 = arith.constant dense<0.000000e+00> : vector<8x128xf32>
    %98 = tpu.matmul %61, %97, %cst_26 {dimension_numbers = #tpu.dot_dimension_numbers<[1], [0], [0], [1], [0, 0, 1, 1], [], []>} : vector<8x40xbf16>, vector<40x128xbf16>, vector<8x128xf32> -> vector<8x128xf32>
    %99 = vector.broadcast %62 : vector<8x1xf32> to vector<8x128xf32>
    %100 = arith.addf %98, %99 : vector<8x128xf32>
    %c0_27 = arith.constant 0 : index
    %c0_28 = arith.constant 0 : index
    %c0_29 = arith.constant 0 : index
    %101 = vector.load %arg6[%c0_27, %c0_28, %c0_29] : memref<1x8x256xf32, #tpu.memory_space<vmem>>, vector<1x8x128xf32>
    %102 = vector.shape_cast %101 : vector<1x8x128xf32> to vector<8x128xf32>
    %103 = vector.shape_cast %100 : vector<8x128xf32> to vector<1x8x128xf32>
    tpu.vector_store %arg6[%c0_27, %c0_28, %c0_29], %103 {strides = array<i32>} : memref<1x8x256xf32, #tpu.memory_space<vmem>>, vector<1x8x128xf32>,
    %104 = vector.extract_strided_slice %39 {offsets = [0, 239], sizes = [4, 128], strides = [1, 1]} : vector<4x512xbf16> to vector<4x128xbf16>
    %cst_30 = arith.constant 0.000000e+00 : bf16
    %105 = vector.broadcast %cst_30 : bf16 to vector<4x128xbf16>
    %106 = vector.shape_cast %58 : vector<1x128xi1> to vector<1x128xi1>
    %107 = vector.broadcast %106 : vector<1x128xi1> to vector<4x128xi1>
    %108 = arith.select %107, %104, %105 : vector<4x128xi1>, vector<4x128xbf16>
    %109 = vector.extract_strided_slice %39 {offsets = [0, 240], sizes = [4, 128], strides = [1, 1]} : vector<4x512xbf16> to vector<4x128xbf16>
    %110 = vector.extract_strided_slice %39 {offsets = [0, 241], sizes = [4, 128], strides = [1, 1]} : vector<4x512xbf16> to vector<4x128xbf16>
    %cst_31 = arith.constant 0.000000e+00 : bf16
    %111 = vector.broadcast %cst_31 : bf16 to vector<4x128xbf16>
    %112 = vector.shape_cast %60 : vector<1x128xi1> to vector<1x128xi1>
    %113 = vector.broadcast %112 : vector<1x128xi1> to vector<4x128xi1>
    %114 = arith.select %113, %110, %111 : vector<4x128xi1>, vector<4x128xbf16>
    %115 = vector.extract_strided_slice %39 {offsets = [0, 255], sizes = [4, 128], strides = [1, 1]} : vector<4x512xbf16> to vector<4x128xbf16>
    %cst_32 = arith.constant 0.000000e+00 : bf16
    %116 = vector.broadcast %cst_32 : bf16 to vector<4x128xbf16>
    %117 = vector.shape_cast %58 : vector<1x128xi1> to vector<1x128xi1>
    %118 = vector.broadcast %117 : vector<1x128xi1> to vector<4x128xi1>
    %119 = arith.select %118, %115, %116 : vector<4x128xi1>, vector<4x128xbf16>
    %120 = vector.extract_strided_slice %39 {offsets = [0, 256], sizes = [4, 128], strides = [1, 1]} : vector<4x512xbf16> to vector<4x128xbf16>
    %121 = vector.extract_strided_slice %39 {offsets = [0, 257], sizes = [4, 128], strides = [1, 1]} : vector<4x512xbf16> to vector<4x128xbf16>
    %cst_33 = arith.constant 0.000000e+00 : bf16
    %122 = vector.broadcast %cst_33 : bf16 to vector<4x128xbf16>
    %123 = vector.shape_cast %60 : vector<1x128xi1> to vector<1x128xi1>
    %124 = vector.broadcast %123 : vector<1x128xi1> to vector<4x128xi1>
    %125 = arith.select %124, %121, %122 : vector<4x128xi1>, vector<4x128xbf16>
    %126 = vector.extract_strided_slice %39 {offsets = [0, 271], sizes = [4, 128], strides = [1, 1]} : vector<4x512xbf16> to vector<4x128xbf16>
    %cst_34 = arith.constant 0.000000e+00 : bf16
    %127 = vector.broadcast %cst_34 : bf16 to vector<4x128xbf16>
    %128 = vector.shape_cast %58 : vector<1x128xi1> to vector<1x128xi1>
    %129 = vector.broadcast %128 : vector<1x128xi1> to vector<4x128xi1>
    %130 = arith.select %129, %126, %127 : vector<4x128xi1>, vector<4x128xbf16>
    %131 = vector.extract_strided_slice %39 {offsets = [0, 272], sizes = [4, 128], strides = [1, 1]} : vector<4x512xbf16> to vector<4x128xbf16>
    %132 = vector.extract_strided_slice %39 {offsets = [0, 273], sizes = [4, 128], strides = [1, 1]} : vector<4x512xbf16> to vector<4x128xbf16>
    %cst_35 = arith.constant 0.000000e+00 : bf16
    %133 = vector.broadcast %cst_35 : bf16 to vector<4x128xbf16>
    %134 = vector.shape_cast %60 : vector<1x128xi1> to vector<1x128xi1>
    %135 = vector.broadcast %134 : vector<1x128xi1> to vector<4x128xi1>
    %136 = arith.select %135, %132, %133 : vector<4x128xi1>, vector<4x128xbf16>
    %137 = vector.extract_strided_slice %37 {offsets = [0, 128], sizes = [4, 128], strides = [1, 1]} : vector<4x256xbf16> to vector<4x128xbf16>
    %138 = tpu.concatenate %108, %109, %114, %119, %120, %125, %130, %131, %136, %137 in 0 : vector<4x128xbf16>, vector<4x128xbf16>, vector<4x128xbf16>, vector<4x128xbf16>, vector<4x128xbf16>, vector<4x128xbf16>, vector<4x128xbf16>, vector<4x128xbf16>, vector<4x128xbf16>, vector<4x128xbf16> -> vector<40x128xbf16>
    %cst_36 = arith.constant dense<0.000000e+00> : vector<8x128xf32>
    %139 = tpu.matmul %61, %138, %cst_36 {dimension_numbers = #tpu.dot_dimension_numbers<[1], [0], [0], [1], [0, 0, 1, 1], [], []>} : vector<8x40xbf16>, vector<40x128xbf16>, vector<8x128xf32> -> vector<8x128xf32>
    %140 = vector.broadcast %62 : vector<8x1xf32> to vector<8x128xf32>
    %141 = arith.addf %139, %140 : vector<8x128xf32>
    %c0_37 = arith.constant 0 : index
    %c0_38 = arith.constant 0 : index
    %c128 = arith.constant 128 : index
    %142 = vector.load %arg6[%c0_37, %c0_38, %c128] : memref<1x8x256xf32, #tpu.memory_space<vmem>>, vector<1x8x128xf32>
    %143 = vector.shape_cast %142 : vector<1x8x128xf32> to vector<8x128xf32>
    %144 = vector.shape_cast %141 : vector<8x128xf32> to vector<1x8x128xf32>
    tpu.vector_store %arg6[%c0_37, %c0_38, %c128], %144 {strides = array<i32>} : memref<1x8x256xf32, #tpu.memory_space<vmem>>, vector<1x8x128xf32>,
    return
  }
  func.func @transform_0(%arg0: i32) -> (i32, i32, i32) {
    %c0_i32 = arith.constant 0 : i32
    %c0_i32_0 = arith.constant 0 : i32
    %c0_i32_1 = arith.constant 0 : i32
    return %arg0, %c0_i32, %c0_i32_0 : i32, i32, i32
  }
  func.func @transform_1(%arg0: i32) -> (i32, i32) {
    %c0_i32 = arith.constant 0 : i32
    %c0_i32_0 = arith.constant 0 : i32
    %c0_i32_1 = arith.constant 0 : i32
    return %c0_i32, %c0_i32_0 : i32, i32
  }
  func.func @transform_2(%arg0: i32) -> (i32, i32) {
    %c0_i32 = arith.constant 0 : i32
    %c0_i32_0 = arith.constant 0 : i32
    %c0_i32_1 = arith.constant 0 : i32
    return %c0_i32, %c0_i32_0 : i32, i32
  }
  func.func @transform_3(%arg0: i32) -> (i32, i32) {
    %c0_i32 = arith.constant 0 : i32
    %c0_i32_0 = arith.constant 0 : i32
    %c0_i32_1 = arith.constant 0 : i32
    return %c0_i32, %c0_i32_0 : i32, i32
  }
  func.func @transform_4(%arg0: i32) -> (i32, i32) {
    %c0_i32 = arith.constant 0 : i32
    %c0_i32_0 = arith.constant 0 : i32
    %c0_i32_1 = arith.constant 0 : i32
    return %c0_i32, %c0_i32_0 : i32, i32
  }
  func.func @transform_5(%arg0: i32) -> (i32, i32, i32) {
    %c0_i32 = arith.constant 0 : i32
    %c0_i32_0 = arith.constant 0 : i32
    %c0_i32_1 = arith.constant 0 : i32
    return %arg0, %c0_i32, %c0_i32_0 : i32, i32, i32
  }
}

</mosaic_0001>

<llo_original>
// kernel: tpu_custom_call.1
$region0: #{tpu_custom_call.1}
  #allocation0 [shape = 'u32[]', space=smem, size = 0x4, offset = 0x4, fixed_abs, tag = 'smem constant byte address 0x4 - core index']
  #allocation1 [shape = 'u32[144,128]{1,0:T(1,128)}', space=vmem, size = 0x12000, scoped, tag = 'internal scratch']
  %s0 = inlined_call_operand.vmem [shape: f32[2,4,256], index: 0, kind: input, shape index: {}]
  %s1 = inlined_call_operand.vmem [shape: f32[4,1], index: 1, kind: input, shape index: {}]
  %s2 = inlined_call_operand.vmem [shape: f32[4,1], index: 2, kind: input, shape index: {}]
  %s3 = inlined_call_operand.vmem [shape: bf16[8,40], index: 3, kind: input, shape index: {}]
  %s4 = inlined_call_operand.vmem [shape: f32[8,1], index: 4, kind: input, shape index: {}]
  %s5 = inlined_call_operand.hbm [shape: f32[2,8,256], index: 5, kind: output, shape index: {}]
  %s6 = sld [smem:[#allocation0]]
  $region53: #{tpu_custom_call.1} parent=0
    _
  %s8 = ssub.s32 1, %s6
  %s9 = scalar_select 0, %s8, %s6
  $region1: #{tpu_custom_call.1} parent=0
    #allocation2 [shape = 'u8[16384]{0}', space=vmem, size = 0x4000, scoped, tag = 'output window, operand 0']
    #allocation3 [shape = 's32[2]{0}', space=sflag, size = 0x8, scoped, tag = 'scoped memory for tpu_custom_call.1']
    %10 = vsyncpa [#allocation3], 0
    %s11 = scalar_lea.sflag [#allocation3], 1
    %12 = vsyncpa %s11, 0
    loop: start=0, step=1, limit=4
    $region2: #{tpu_custom_call.1} parent=1 // loop_pre_header
      _
    $region3: #{tpu_custom_call.1} parent=1 // loop_header
      %s14 = sphi 0, %s18
      %p15 = scmp.ge.s32.totalorder %s14, 4
      %s24 = sphi 0, %s26
      %s27 = sphi 0, %s24
      %s28 = sphi 0, %s27
      %s44 = sphi 0, %s28
      %s48 = sphi 0, %s48
      %s50 = sphi 0, %s48
      %s51 = sphi 0, %s50
      %s65 = sphi 0, %s51
      %s69 = sphi 0, %s69
      %s71 = sphi 0, %s69
      %s72 = sphi 0, %s71
      %s86 = sphi 0, %s72
      %s90 = sphi 0, %s90
      %s92 = sphi 0, %s90
      %s93 = sphi 0, %s92
      %s107 = sphi 0, %s93
      %s111 = sphi 0, %s111
      %s113 = sphi 0, %s111
      %s114 = sphi 0, %s113
      %s128 = sphi 0, %s114
      %s134 = sphi 0, %s136
      %s137 = sphi 0, %s134
      %s138 = sphi 0, %s137
      %s154 = sphi 0, %s138
    $region4: #{tpu_custom_call.1} parent=1 // loop_header_branch
      %17 = sbr.rel (%p15) target = $region8
    $region5: #{tpu_custom_call.1} parent=1 // loop_body
      %s19 = ssub.s32 %s14, 1
      %s20 = ssub.s32 %s14, 2
      %s21 = sadd.s32 %s14, 1
      %s22 = ssub.s32 %s14, %s21
      %p23 = scmp.eq.s32.totalorder %s22, 0
      %s25 = sadd.s32 %s24, 1
      %s26 = scalar_select %p23, %s24, %s25
      %p29 = pneg %p23
      %p30 = scmp.eq.s32.totalorder %s14, 1
      %p31 = por %p29, %p30
      %p32 = scmp.ne.s32.totalorder %s24, %s27
      %p33 = scmp.eq.s32.totalorder %s14, 0
      %p34 = por %p32, %p33
      %p35 = scmp.ne.s32.totalorder %s24, %s27
      %p36 = scmp.eq.s32.totalorder %s19, 1
      %p37 = por %p35, %p36
      %p38 = scmp.ne.s32.totalorder %s27, %s28
      %p39 = scmp.eq.s32.totalorder %s19, 0
      %p40 = por %p38, %p39
      %p41 = scmp.ne.s32.totalorder %s27, %s28
      %p42 = scmp.eq.s32.totalorder %s20, 1
      %p43 = por %p41, %p42
      %p45 = scmp.ne.s32.totalorder %s28, %s44
      %p46 = scmp.eq.s32.totalorder %s20, 0
      %p47 = por %p45, %p46
      %s49 = sadd.s32 %s48, 1
      %p52 = scmp.eq.s32.totalorder %s14, 1
      %p53 = scmp.ne.s32.totalorder %s48, %s50
      %p54 = scmp.eq.s32.totalorder %s14, 0
      %p55 = por %p53, %p54
      %p56 = scmp.ne.s32.totalorder %s48, %s50
      %p57 = scmp.eq.s32.totalorder %s19, 1
      %p58 = por %p56, %p57
      %p59 = scmp.ne.s32.totalorder %s50, %s51
      %p60 = scmp.eq.s32.totalorder %s19, 0
      %p61 = por %p59, %p60
      %p62 = scmp.ne.s32.totalorder %s50, %s51
      %p63 = scmp.eq.s32.totalorder %s20, 1
      %p64 = por %p62, %p63
      %p66 = scmp.ne.s32.totalorder %s51, %s65
      %p67 = scmp.eq.s32.totalorder %s20, 0
      %p68 = por %p66, %p67
      %s70 = sadd.s32 %s69, 1
      %p73 = scmp.eq.s32.totalorder %s14, 1
      %p74 = scmp.ne.s32.totalorder %s69, %s71
      %p75 = scmp.eq.s32.totalorder %s14, 0
      %p76 = por %p74, %p75
      %p77 = scmp.ne.s32.totalorder %s69, %s71
      %p78 = scmp.eq.s32.totalorder %s19, 1
      %p79 = por %p77, %p78
      %p80 = scmp.ne.s32.totalorder %s71, %s72
      %p81 = scmp.eq.s32.totalorder %s19, 0
      %p82 = por %p80, %p81
      %p83 = scmp.ne.s32.totalorder %s71, %s72
      %p84 = scmp.eq.s32.totalorder %s20, 1
      %p85 = por %p83, %p84
      %p87 = scmp.ne.s32.totalorder %s72, %s86
      %p88 = scmp.eq.s32.totalorder %s20, 0
      %p89 = por %p87, %p88
      %s91 = sadd.s32 %s90, 1
      %p94 = scmp.eq.s32.totalorder %s14, 1
      %p95 = scmp.ne.s32.totalorder %s90, %s92
      %p96 = scmp.eq.s32.totalorder %s14, 0
      %p97 = por %p95, %p96
      %p98 = scmp.ne.s32.totalorder %s90, %s92
      %p99 = scmp.eq.s32.totalorder %s19, 1
      %p100 = por %p98, %p99
      %p101 = scmp.ne.s32.totalorder %s92, %s93
      %p102 = scmp.eq.s32.totalorder %s19, 0
      %p103 = por %p101, %p102
      %p104 = scmp.ne.s32.totalorder %s92, %s93
      %p105 = scmp.eq.s32.totalorder %s20, 1
      %p106 = por %p104, %p105
      %p108 = scmp.ne.s32.totalorder %s93, %s107
      %p109 = scmp.eq.s32.totalorder %s20, 0
      %p110 = por %p108, %p109
      %s112 = sadd.s32 %s111, 1
      %p115 = scmp.eq.s32.totalorder %s14, 1
      %p116 = scmp.ne.s32.totalorder %s111, %s113
      %p117 = scmp.eq.s32.totalorder %s14, 0
      %p118 = por %p116, %p117
      %p119 = scmp.ne.s32.totalorder %s111, %s113
      %p120 = scmp.eq.s32.totalorder %s19, 1
      %p121 = por %p119, %p120
      %p122 = scmp.ne.s32.totalorder %s113, %s114
      %p123 = scmp.eq.s32.totalorder %s19, 0
      %p124 = por %p122, %p123
      %p125 = scmp.ne.s32.totalorder %s113, %s114
      %p126 = scmp.eq.s32.totalorder %s20, 1
      %p127 = por %p125, %p126
      %p129 = scmp.ne.s32.totalorder %s114, %s128
      %p130 = scmp.eq.s32.totalorder %s20, 0
      %p131 = por %p129, %p130
      %s132 = ssub.s32 %s14, %s21
      %p133 = scmp.eq.s32.totalorder %s132, 0
      %s135 = sadd.s32 %s134, 1
      %s136 = scalar_select %p133, %s134, %s135
      %p139 = pneg %p133
      %p140 = scmp.eq.s32.totalorder %s14, 1
      %p141 = por %p139, %p140
      %p142 = scmp.ne.s32.totalorder %s134, %s137
      %p143 = scmp.eq.s32.totalorder %s14, 0
      %p144 = por %p142, %p143
      %p145 = scmp.ne.s32.totalorder %s134, %s137
      %p146 = scmp.eq.s32.totalorder %s19, 1
      %p147 = por %p145, %p146
      %p148 = scmp.ne.s32.totalorder %s137, %s138
      %p149 = scmp.eq.s32.totalorder %s19, 0
      %p150 = por %p148, %p149
      %p151 = scmp.ne.s32.totalorder %s137, %s138
      %p152 = scmp.eq.s32.totalorder %s20, 1
      %p153 = por %p151, %p152
      %p155 = scmp.ne.s32.totalorder %s138, %s154
      %p156 = scmp.eq.s32.totalorder %s20, 0
      %p157 = por %p155, %p156
      %p158 = scmp.le.s32.totalorder 1, %s14
      %p159 = scmp.lt.s32.totalorder %s14, 3
      %p160 = pnand %p158, %p159
      %p161 = pneg %p160
      // Predicated region
      $region9: #{tpu_custom_call.1} parent=5 // pred_check
        _
      $region10: #{tpu_custom_call.1} parent=5 // pred_check_branch
        %163 = sbr.rel (%p160) target = $region12
      $region11: #{tpu_custom_call.1} parent=5 // pred_region
        %s164 = ssub.s32 %s14, 1
        // Predicated region
        $region13: #{tpu_custom_call.1} parent=11 // pred_check
          %p165 = pneg %p61
        $region14: #{tpu_custom_call.1} parent=11 // pred_check_branch
          %167 = sbr.rel (%p165) target = $region16
        $region15: #{tpu_custom_call.1} parent=11 // pred_region
          _
        $region16: #{tpu_custom_call.1} parent=11 // pred_fallthru
          _
        // Predicated region
        $region17: #{tpu_custom_call.1} parent=11 // pred_check
          %p168 = pneg %p82
        $region18: #{tpu_custom_call.1} parent=11 // pred_check_branch
          %170 = sbr.rel (%p168) target = $region20
        $region19: #{tpu_custom_call.1} parent=11 // pred_region
          _
        $region20: #{tpu_custom_call.1} parent=11 // pred_fallthru
          _
        // Predicated region
        $region21: #{tpu_custom_call.1} parent=11 // pred_check
          %p171 = pneg %p103
        $region22: #{tpu_custom_call.1} parent=11 // pred_check_branch
          %173 = sbr.rel (%p171) target = $region24
        $region23: #{tpu_custom_call.1} parent=11 // pred_region
          _
        $region24: #{tpu_custom_call.1} parent=11 // pred_fallthru
          _
        // Predicated region
        $region25: #{tpu_custom_call.1} parent=11 // pred_check
          %p174 = pneg %p124
        $region26: #{tpu_custom_call.1} parent=11 // pred_check_branch
          %176 = sbr.rel (%p174) target = $region28
        $region27: #{tpu_custom_call.1} parent=11 // pred_region
          _
        $region28: #{tpu_custom_call.1} parent=11 // pred_fallthru
          _
      $region12: #{tpu_custom_call.1} parent=5 // pred_fallthru
        _
      %p177 = scmp.lt.s32.totalorder %s14, 2
      // Predicated region
      $region29: #{tpu_custom_call.1} parent=5 // pred_check
        %p178 = pneg %p177
      $region30: #{tpu_custom_call.1} parent=5 // pred_check_branch
        %180 = sbr.rel (%p178) target = $region32
      $region31: #{tpu_custom_call.1} parent=5 // pred_region
        // Predicated region
        $region33: #{tpu_custom_call.1} parent=31 // pred_check
          %p181 = pneg %p34
        $region34: #{tpu_custom_call.1} parent=31 // pred_check_branch
          %183 = sbr.rel (%p181) target = $region36
        $region35: #{tpu_custom_call.1} parent=31 // pred_region
          %p184 = scmp.lt.s32.totalorder %s14, 1
          %s185 = scalar_select %p184, %s14, 1
          %s186 = smul.addr %s185, 2
          %s187 = smul.addr %s186, 4
          %s188 = scalar_lea.vmem %s0, %s187
        $region36: #{tpu_custom_call.1} parent=31 // pred_fallthru
          _
      $region32: #{tpu_custom_call.1} parent=5 // pred_fallthru
        _
      %p189 = scmp.le.s32.totalorder 1, %s14
      %p190 = scmp.lt.s32.totalorder %s14, 3
      %p191 = pnand %p189, %p190
      %p192 = pneg %p191
      // Predicated region
      $region37: #{tpu_custom_call.1} parent=5 // pred_check
        _
      $region38: #{tpu_custom_call.1} parent=5 // pred_check_branch
        %194 = sbr.rel (%p191) target = $region40
      $region39: #{tpu_custom_call.1} parent=5 // pred_region
        %s195 = ssub.s32 %s14, 1
        %p196 = scmp.lt.s32.totalorder %s19, 1
        %s197 = scalar_select %p196, %s19, 1
        %s198 = smul.addr %s197, 2
        %s199 = smul.addr %s198, 4
        %s200 = scalar_lea.vmem %s0, %s199
        %p201 = pneg %p40
        %p202 = pneg %p37
        %p203 = pneg %p61
        %p204 = pneg %p58
        %p205 = pneg %p82
        %p206 = pneg %p79
        %p207 = pneg %p103
        %p208 = pneg %p100
        %p209 = pneg %p124
        %p210 = pneg %p121
        %p211 = pneg %p150
        %p212 = pneg %p147
        %s213 = sand.u32 %s137, 1
        %s214 = scalar_lea.sflag [#allocation3], %s213
        %s215 = sand.u32 %s137, 1
        %s216 = smul.addr %s215, 16
        %s217 = scalar_lea.vmem [#allocation2], %s216
        %p218 = scmp.lt.s32.totalorder %s19, 1
        %s219 = scalar_select %p218, %s19, 1
        %s220 = smul.addr %s219, 2
        %s221 = smul.addr %s220, 4
        %s222 = scalar_lea.vmem %s0, %s221
        %v226 = vld [vmem:[%s222] sm:$0xff]
        %v228 = vcombine.high %v226, %v226
        %vm230 = vcmask 1043456
        %v231 = vsel %vm230, %v226, 0.0
        %v232 = vsel %vm230, %v228, 0.0
        %v233 = vadd.f32 %v231, %v232
        %234 = vadd.xlane.f32.xlu0 %v233
        %v235 = vpop.xlane.xlu0 %234
        %v236 = vrot.slane %v235, 4
        %v237 = vadd.f32 %v235, %v236
        %v238 = vrot.slane %v237, 2
        %v239 = vadd.f32 %v237, %v238
        %v240 = vrot.slane %v239, 1
        %v241 = vadd.f32 %v239, %v240
        %v242 = vrcp.pop 1024.0
        %v243 = vmul.f32 %v241, %v242
        %v244 = vsub.f32 %v226, %v243
        %v245 = vmul.f32 %v244, %v244
        %v247 = vcombine.high %v245, %v245
        %v249 = vsel %vm230, %v245, 0.0
        %v250 = vsel %vm230, %v247, 0.0
        %v251 = vadd.f32 %v249, %v250
        %252 = vadd.xlane.f32.xlu0 %v251
        %v253 = vpop.xlane.xlu0 %252
        %v254 = vrot.slane %v253, 4
        %v255 = vadd.f32 %v253, %v254
        %v256 = vrot.slane %v255, 2
        %v257 = vadd.f32 %v255, %v256
        %v258 = vrot.slane %v257, 1
        %v259 = vadd.f32 %v257, %v258
        %v260 = vmul.f32 %v259, %v242
        %v261 = vadd.f32 %v260, 1e-05
        %v262 = vrsqrt.pop %v261
        %v263 = vmul.f32 %v244, %v262
        %v264 = vld [vmem:[%s1] sm:$0xf]
        %266 = vset.pattern.permute.xlu0 0
        %267 = vperm.xlu0 %266, %v264
        %v268 = vpop.permute.xlu0 %267
        %v270 = vunpack.c.l.s4 839922192
        %v271 = vunpack.c.0.s8 %v270
        %v272 = vlaneseq
        %v273 = vshrl.u32 %v272, 7
        %v274 = vsub.s32 %v271, %v273
        %v275 = vrot.slane %v268, %v274
        %v277 = vmul.f32 %v263, %v275
        %v278 = vld [vmem:[%s2] sm:$0xf]
        %280 = vset.pattern.permute.xlu0 0
        %281 = vperm.xlu0 %280, %v278
        %v282 = vpop.permute.xlu0 %281
        %v284 = vunpack.c.l.s4 839922192
        %v285 = vunpack.c.0.s8 %v284
        %v286 = vlaneseq
        %v287 = vshrl.u32 %v286, 7
        %v288 = vsub.s32 %v285, %v287
        %v289 = vrot.slane %v282, %v288
        %v291 = vadd.f32 %v277, %v289
        %v292 = vxor.u32 %v291, 2147483648
        %v293 = vmul.f32 %v292, 1.442695
        %v294 = vpow.pop %v293
        %v295 = vadd.f32 %v294, 1.0
        %v296 = vrcp.pop %v295
        %v297 = vmul.f32 1.0, %v296
        %v298 = vmul.f32 %v291, %v297
        %v300 = vcombine.high %v298, %v298
        %v302 = vpack.c.bf16 %v298, %v298
        %v303 = vpack.c.bf16 %v300, %v300
        %v304 = vpack.c.bf16 %v226, %v226
        %v305 = vpack.c.bf16 %v228, %v228
        %v306 = vlaneseq
        %v307 = vand.u32 %v306, 127
        %vm308 = vcmp.lt.s32.totalorder %v307, 0
        %v309 = vsub.s32 0, %v307
        %v310 = vsel %vm308, %v309, %v307
        %v311 = vshrl.u32 %v310, 4
        %v312 = vand.u32 %v310, 15
        %v313 = vsub.s32 0, %v312
        %v314 = vsel %vm308, %v313, %v312
        %vm315 = vcmp.ne.s32.totalorder %v314, 0
        %vm316 = vcmp.lt.s32.totalorder %v314, 0
        %vm317 = vmand %vm316, %vm315
        %v318 = vadd.s32 %v314, 16
        %v319 = vsel %vm317, %v318, %v314
        %vm320 = vcmp.ge.s32.totalorder %v319, 1
        %vm321 = vcmp.le.s32.totalorder %v319, 14
        %v322 = vld [vmem:[%s3] sm:$0xf]
        %v323 = vld [vmem:[%s4] sm:$0xff]
        %v324 = vsel %vm320, 1, 0
        %vm325 = vcmp.eq.s32.totalorder %v324, 1
        %vm326 = vmpackc.low %vm325, %vm325
        %v327 = vsel %vm326, 65537, 0
        %v328 = vlaneseq
        %v329 = vshrl.u32 %v328, 7
        %v330 = vsub.s32 0, %v329
        %v331 = vrot.slane %v327, %v330
        %332 = vrot.lane.b32.xlu0 %v331, 111
        %v333 = vpop.permute.xlu0 %332
        %vm334 = vcmp.ne.s16.totalorder %v333, 0
        %v335 = vsel %vm334, %v302, 0
        %v336 = vsel %vm321, 1, 0
        %vm337 = vcmp.eq.s32.totalorder %v336, 1
        %vm338 = vmpackc.low %vm337, %vm337
        %v339 = vsel %vm338, 65537, 0
        %v340 = vlaneseq
        %v341 = vshrl.u32 %v340, 7
        %v342 = vsub.s32 0, %v341
        %v343 = vrot.slane %v339, %v342
        %344 = vrot.lane.b32.xlu0 %v343, 113
        %v345 = vpop.permute.xlu0 %344
        %vm346 = vcmp.ne.s16.totalorder %v345, 0
        %v347 = vsel %vm346, %v302, 0
        %348 = vrot.lane.b32.xlu0 %v331, 127
        %v349 = vpop.permute.xlu0 %348
        %vm350 = vcmp.ne.s16.totalorder %v349, 0
        %v351 = vsel %vm350, %v302, 0
        %352 = vrot.lane.b32.xlu0 %v343, 1
        %v353 = vpop.permute.xlu0 %352
        %vm354 = vcmp.ne.s16.totalorder %v353, 0
        %v355 = vsel %vm354, %v302, 0
        %v356 = vsel %vm354, %v303, 0
        %357 = vrot.lane.b32.xlu0 %v331, 15
        %v358 = vpop.permute.xlu0 %357
        %vm359 = vcmp.ne.s16.totalorder %v358, 0
        %v360 = vsel %vm359, %v302, 0
        %v361 = vsel %vm359, %v303, 0
        %362 = vrot.lane.b32.xlu0 %v343, 17
        %v363 = vpop.permute.xlu0 %362
        %vm364 = vcmp.ne.s16.totalorder %v363, 0
        %v365 = vsel %vm364, %v302, 0
        %v366 = vsel %vm364, %v303, 0
        %v369 = vrot.slane 0, 6
        %v370 = vrot.slane %v302, 6
        %371 = vrot.lane.b32.xlu0 %v369, 127
        %v372 = vpop.permute.xlu0 %371
        %373 = vrot.lane.b32.xlu0 %v370, 127
        %v374 = vpop.permute.xlu0 %373
        %vm375 = vcmask 1039360
        %v376 = vsel %vm375, %v372, %v374
        %v378 = vrot.slane 0, 4
        %v379 = vrot.slane %v347, 4
        %380 = vrot.lane.b32.xlu0 %v378, 126
        %v381 = vpop.permute.xlu0 %380
        %382 = vrot.lane.b32.xlu0 %v379, 126
        %v383 = vpop.permute.xlu0 %382
        %vm384 = vcmask 1031168
        %v385 = vsel %vm384, %v381, %v383
        %v387 = vrot.slane 0, 2
        %v388 = vrot.slane %v351, 2
        %389 = vrot.lane.b32.xlu0 %v387, 112
        %v390 = vpop.permute.xlu0 %389
        %391 = vrot.lane.b32.xlu0 %v388, 112
        %v392 = vpop.permute.xlu0 %391
        %vm393 = vcmask 916480
        %v394 = vsel %vm393, %v390, %v392
        %395 = vrot.lane.b32.xlu0 %v302, 111
        %v396 = vpop.permute.xlu0 %395
        %v399 = vrot.slane %v355, 6
        %v400 = vrot.slane %v356, 6
        %401 = vrot.lane.b32.xlu0 %v399, 110
        %v402 = vpop.permute.xlu0 %401
        %403 = vrot.lane.b32.xlu0 %v400, 110
        %v404 = vpop.permute.xlu0 %403
        %vm405 = vcmask 900096
        %v406 = vsel %vm405, %v402, %v404
        %v409 = vrot.slane %v360, 4
        %v410 = vrot.slane %v361, 4
        %411 = vrot.lane.b32.xlu0 %v409, 96
        %v412 = vpop.permute.xlu0 %411
        %413 = vrot.lane.b32.xlu0 %v410, 96
        %v414 = vpop.permute.xlu0 %413
        %vm415 = vcmask 785408
        %v416 = vsel %vm415, %v412, %v414
        %v418 = vrot.slane %v302, 2
        %v419 = vrot.slane %v303, 2
        %420 = vrot.lane.b32.xlu0 %v418, 95
        %v421 = vpop.permute.xlu0 %420
        %422 = vrot.lane.b32.xlu0 %v419, 95
        %v423 = vpop.permute.xlu0 %422
        %vm424 = vcmask 777216
        %v425 = vsel %vm424, %v421, %v423
        %428 = vrot.lane.b32.xlu0 %v365, 94
        %v429 = vpop.permute.xlu0 %428
        %430 = vrot.lane.b32.xlu0 %v366, 94
        %v431 = vpop.permute.xlu0 %430
        %vm432 = vcmask 769024
        %v433 = vsel %vm432, %v429, %v431
        %v435 = vrot.slane %v304, 6
        %436 = vrot.lane.b32.xlu0 %v435, 111
        %v437 = vpop.permute.xlu0 %436
        %vm438 = vcmask 1041408
        %v441 = vsel %vm438, 0, %v376
        %v444 = vsel %vm438, %v335, %v374
        %v446 = vsel %vm230, %v441, %v385
        %v448 = vsel %vm230, %v444, %v383
        %vm449 = vcmask 1045504
        %v451 = vsel %vm449, %v446, %v394
        %v453 = vsel %vm449, %v448, %v392
        %v456 = vsel %vm438, %v396, %v402
        %v458 = vsel %vm438, %v396, %v406
        %v460 = vsel %vm230, %v456, %v412
        %v462 = vsel %vm230, %v458, %v416
        %v464 = vsel %vm449, %v460, %v421
        %v466 = vsel %vm449, %v462, %v425
        %v469 = vsel %vm438, %v429, %v437
        %v471 = vsel %vm438, %v433, %v437
        %473 = vset.pattern.permute.xlu0 0
        %474 = vperm.xlu0 %473, %v323
        %v475 = vpop.permute.xlu0 %474
        %483 = vrot.lane.b32.xlu0 %v451, 17
        %v484 = vpop.permute.xlu0 %483
        %485 = vrot.lane.b32.xlu0 %v453, 17
        %v486 = vpop.permute.xlu0 %485
        %487 = vrot.lane.b32.xlu0 %v464, 17
        %v488 = vpop.permute.xlu0 %487
        %489 = vrot.lane.b32.xlu0 %v466, 17
        %v490 = vpop.permute.xlu0 %489
        %491 = vrot.lane.b32.xlu0 %v469, 17
        %v492 = vpop.permute.xlu0 %491
        %493 = vrot.lane.b32.xlu0 %v471, 17
        %v494 = vpop.permute.xlu0 %493
        %vm495 = vcmask 138240
        %v496 = vsel %vm495, %v484, %v486
        %v497 = vsel %vm495, %v488, %v490
        %v498 = vsel %vm495, %v492, %v494
        %vm501 = vcmask 326656
        %v503 = vsel %vm501, %v322, 0
        %v506 = vsel %vm230, %v498, 0
        %508 = vmatprep.subr.bf16.mxu0 0
        %509 = vmatpush1.bf16.msra.mxu0 0
        %510 = vmatprep.subr.bf16.mxu0 0
        %511 = vmatpush1.bf16.msra.mxu0 0
        %512 = vmatprep.subr.bf16.mxu0 0
        %513 = vmatpush1.bf16.msra.mxu0 0
        %514 = vmatprep.subr.bf16.mxu0 0
        %515 = vmatpush1.bf16.msra.mxu0 0
        %516 = vmatprep.subr.bf16.mxu0 0
        %517 = vmatpush1.bf16.msra.mxu0 0
        %518 = vmatprep.subr.bf16.mxu0 0
        %519 = vmatpush1.bf16.msra.mxu0 %v506
        %520 = vmatprep.subr.bf16.mxu0 0
        %521 = vmatpush1.bf16.msra.mxu0 %v497
        %522 = vmatprep.subr.bf16.mxu0 0
        %523 = vmatpush1.bf16.msra.mxu0 %v496
        %524 = vmatprep.subr.bf16.mxu0 0
        %525 = vmatpush2.bf16.msra.mxu0 0
        %526 = vmatprep.subr.bf16.mxu0 0
        %527 = vmatpush2.bf16.msra.mxu0 0
        %528 = vmatprep.subr.bf16.mxu0 0
        %529 = vmatpush2.bf16.msra.mxu0 0
        %530 = vmatprep.subr.bf16.mxu0 0
        %531 = vmatpush2.bf16.msra.mxu0 0
        %532 = vmatprep.subr.bf16.mxu0 0
        %533 = vmatpush2.bf16.msra.mxu0 0
        %534 = vmatprep.subr.bf16.mxu0 0
        %535 = vmatpush2.bf16.msra.mxu0 0
        %536 = vmatprep.subr.bf16.mxu0 0
        %537 = vmatpush2.bf16.msra.mxu0 0
        %538 = vmatprep.subr.bf16.mxu0 0
        %539 = vmatpush2.bf16.msra.mxu0 0
        %540 = vmatprep.mubr.bf16.mxu0 0
        %541 = vmatmul.mubr.bf16.gmra.mxu0 %v503
        %v542 = vpop.f32.mrf.mxu0
        %v543 = vadd.f32 %v475, %v542
        %v544 = vpop.f32.mrf.mxu0
        %v545 = vpop.f32.mrf.mxu0
        %v546 = vpop.f32.mrf.mxu0
        %547 = vdwg.mxu0
        %548 = vst [vmem:[%s217] sm:$0xff] %v543
        %v549 = vsel %vm334, %v303, 0
        %v550 = vsel %vm346, %v303, 0
        %v551 = vsel %vm350, %v303, 0
        %v552 = vrot.slane %v303, 6
        %553 = vrot.lane.b32.xlu0 %v552, 127
        %v554 = vpop.permute.xlu0 %553
        %v555 = vsel %vm375, %v374, %v554
        %v557 = vrot.slane %v550, 4
        %558 = vrot.lane.b32.xlu0 %v557, 126
        %v559 = vpop.permute.xlu0 %558
        %v560 = vsel %vm384, %v383, %v559
        %v562 = vrot.slane %v551, 2
        %563 = vrot.lane.b32.xlu0 %v562, 112
        %v564 = vpop.permute.xlu0 %563
        %v565 = vsel %vm393, %v392, %v564
        %566 = vrot.lane.b32.xlu0 %v303, 111
        %v567 = vpop.permute.xlu0 %566
        %568 = vrot.lane.b32.xlu0 %v369, 110
        %v569 = vpop.permute.xlu0 %568
        %v570 = vsel %vm405, %v404, %v569
        %571 = vrot.lane.b32.xlu0 %v378, 96
        %v572 = vpop.permute.xlu0 %571
        %v573 = vsel %vm415, %v414, %v572
        %574 = vrot.lane.b32.xlu0 %v387, 95
        %v575 = vpop.permute.xlu0 %574
        %v576 = vsel %vm424, %v423, %v575
        %577 = vrot.lane.b32.xlu0 0, 94
        %v578 = vpop.permute.xlu0 %577
        %v579 = vsel %vm432, %v431, %v578
        %v581 = vrot.slane %v305, 6
        %582 = vrot.lane.b32.xlu0 %v581, 111
        %v583 = vpop.permute.xlu0 %582
        %v585 = vsel %vm438, %v335, %v555
        %v588 = vsel %vm438, %v549, %v554
        %v590 = vsel %vm230, %v585, %v560
        %v592 = vsel %vm230, %v588, %v559
        %v594 = vsel %vm449, %v590, %v565
        %v596 = vsel %vm449, %v592, %v564
        %v599 = vsel %vm438, %v567, %v404
        %v601 = vsel %vm438, %v567, %v570
        %v603 = vsel %vm230, %v599, %v414
        %v605 = vsel %vm230, %v601, %v573
        %v607 = vsel %vm449, %v603, %v423
        %v609 = vsel %vm449, %v605, %v576
        %v612 = vsel %vm438, %v431, %v583
        %v614 = vsel %vm438, %v579, %v583
        %621 = vrot.lane.b32.xlu0 %v594, 17
        %v622 = vpop.permute.xlu0 %621
        %623 = vrot.lane.b32.xlu0 %v596, 17
        %v624 = vpop.permute.xlu0 %623
        %625 = vrot.lane.b32.xlu0 %v607, 17
        %v626 = vpop.permute.xlu0 %625
        %627 = vrot.lane.b32.xlu0 %v609, 17
        %v628 = vpop.permute.xlu0 %627
        %629 = vrot.lane.b32.xlu0 %v612, 17
        %v630 = vpop.permute.xlu0 %629
        %631 = vrot.lane.b32.xlu0 %v614, 17
        %v632 = vpop.permute.xlu0 %631
        %v633 = vsel %vm495, %v622, %v624
        %v634 = vsel %vm495, %v626, %v628
        %v635 = vsel %vm495, %v630, %v632
        %v639 = vsel %vm230, %v635, 0
        %641 = vmatprep.subr.bf16.mxu0 0
        %642 = vmatpush1.bf16.msra.mxu0 0
        %643 = vmatprep.subr.bf16.mxu0 0
        %644 = vmatpush1.bf16.msra.mxu0 0
        %645 = vmatprep.subr.bf16.mxu0 0
        %646 = vmatpush1.bf16.msra.mxu0 0
        %647 = vmatprep.subr.bf16.mxu0 0
        %648 = vmatpush1.bf16.msra.mxu0 0
        %649 = vmatprep.subr.bf16.mxu0 0
        %650 = vmatpush1.bf16.msra.mxu0 0
        %651 = vmatprep.subr.bf16.mxu0 0
        %652 = vmatpush1.bf16.msra.mxu0 %v639
        %653 = vmatprep.subr.bf16.mxu0 0
        %654 = vmatpush1.bf16.msra.mxu0 %v634
        %655 = vmatprep.subr.bf16.mxu0 0
        %656 = vmatpush1.bf16.msra.mxu0 %v633
        %657 = vmatprep.subr.bf16.mxu0 0
        %658 = vmatpush2.bf16.msra.mxu0 0
        %659 = vmatprep.subr.bf16.mxu0 0
        %660 = vmatpush2.bf16.msra.mxu0 0
        %661 = vmatprep.subr.bf16.mxu0 0
        %662 = vmatpush2.bf16.msra.mxu0 0
        %663 = vmatprep.subr.bf16.mxu0 0
        %664 = vmatpush2.bf16.msra.mxu0 0
        %665 = vmatprep.subr.bf16.mxu0 0
        %666 = vmatpush2.bf16.msra.mxu0 0
        %667 = vmatprep.subr.bf16.mxu0 0
        %668 = vmatpush2.bf16.msra.mxu0 0
        %669 = vmatprep.subr.bf16.mxu0 0
        %670 = vmatpush2.bf16.msra.mxu0 0
        %671 = vmatprep.subr.bf16.mxu0 0
        %672 = vmatpush2.bf16.msra.mxu0 0
        %673 = vmatprep.mubr.bf16.mxu0 0
        %674 = vmatmul.mubr.bf16.gmra.mxu0 %v503
        %v675 = vpop.f32.mrf.mxu0
        %v676 = vadd.f32 %v475, %v675
        %v677 = vpop.f32.mrf.mxu0
        %v678 = vpop.f32.mrf.mxu0
        %v679 = vpop.f32.mrf.mxu0
        %680 = vdwg.mxu0
        %681 = vst [vmem:[%s217 + $0x8] sm:$0xff] %v676
        %s682 = sand.u32 %s137, 1
        %s683 = scalar_lea.sflag [#allocation3], %s682
        %s684 = sand.u32 %s137, 1
        %s685 = smul.addr %s684, 16
        %s686 = scalar_lea.vmem [#allocation2], %s685
        // Predicated region
        $region41: #{tpu_custom_call.1} parent=39 // pred_check
          %p687 = pneg %p147
        $region42: #{tpu_custom_call.1} parent=39 // pred_check_branch
          %689 = sbr.rel (%p687) target = $region44
        $region43: #{tpu_custom_call.1} parent=39 // pred_region
          %s691 = ssub.s32 256, 256
          %692 = vsyncadd %s683, %s691
          %s693 = smul.addr %s19, 2
          %s694 = smul.addr %s693, 128
          %s695 = scalar_lea.hbm %s5, %s694
          %s697 = sshll.u32 %s686, 4
          %s698 = int_to_ptr.vmem [resolvable:$true] %s697
          %700 = dma.vmem_to_hbm [thread:$0]  %s698, 256, %s695, %s683
        $region44: #{tpu_custom_call.1} parent=39 // pred_fallthru
          _
      $region40: #{tpu_custom_call.1} parent=5 // pred_fallthru
        _
      %p701 = scmp.le.s32.totalorder 2, %s14
      // Predicated region
      $region45: #{tpu_custom_call.1} parent=5 // pred_check
        %p702 = pneg %p701
      $region46: #{tpu_custom_call.1} parent=5 // pred_check_branch
        %704 = sbr.rel (%p702) target = $region48
      $region47: #{tpu_custom_call.1} parent=5 // pred_region
        %s705 = ssub.s32 %s14, 2
        // Predicated region
        $region49: #{tpu_custom_call.1} parent=47 // pred_check
          %p706 = pneg %p153
        $region50: #{tpu_custom_call.1} parent=47 // pred_check_branch
          %708 = sbr.rel (%p706) target = $region52
        $region51: #{tpu_custom_call.1} parent=47 // pred_region
          %s709 = sand.u32 %s138, 1
          %s710 = scalar_lea.sflag [#allocation3], %s709
          %s711 = sand.u32 %s138, 1
          %s712 = smul.addr %s711, 16
          %s713 = scalar_lea.vmem [#allocation2], %s712
          %714 = dma.done %s710, 256
        $region52: #{tpu_custom_call.1} parent=47 // pred_fallthru
          _
      $region48: #{tpu_custom_call.1} parent=5 // pred_fallthru
        _
    $region6: #{tpu_custom_call.1} parent=1 // loop_footer
      %s18 = sadd.s32 1, %s14
    $region7: #{tpu_custom_call.1} parent=1 // loop_footer_branch
      %13 = sbr.rel target = $region3
    $region8: #{tpu_custom_call.1} parent=1 // loop_exit
      _
    %715 = vsyncpa [#allocation3], 1
    %s716 = scalar_lea.sflag [#allocation3], 1
    %717 = vsyncpa %s716, 1

</llo_original>
